<compile_context>
chip_gen: v6e
topology: v6e:2x2x1
jax: 0.10.0
libtpu: 0.0.40
codegen_flags: <defaults>
</compile_context>

<pallas_src>
import functools

import jax
import jax.numpy as jnp
from jax import lax
from jax.experimental import pallas as pl
from jax.experimental.pallas import tpu as pltpu

LANE = 128  # vreg lane width
SUBL = 8    # sublane granularity (32-bit dtypes)


def _dice_loss_kernel(x_ref, t_ref, out_ref, *,
                      n_valid, ignore_target, block_rows,
                      blocks_per_core, num_blocks):
    c = pl.program_id(0)          # parallel (core) axis
    j = pl.program_id(1)          # arbitrary (reduction) axis

    # Per-core accumulator lives in the resident output block: (2, 8, 128).
    @pl.when(j == 0)
    def _():
        out_ref[...] = jnp.zeros_like(out_ref)

    b = c * blocks_per_core + j                 # unclamped global block index
    is_real = b < num_blocks                    # overrun blocks are skipped
    is_last_real = b == num_blocks - 1          # only block that can be ragged

    x = x_ref[...].astype(jnp.float32)          # (block_rows, 128) logits
    t_i = t_ref[...]                            # (block_rows, 128) int32 targets
    t = t_i.astype(jnp.float32)

    # sigmoid(x) == 0.5*tanh(0.5*x) + 0.5 : single EUP transcendental.
    sig = 0.5 * jnp.tanh(0.5 * x) + 0.5

    keep = t_i != ignore_target                 # exact integer compare
    mn = jnp.minimum(sig, t)
    mx = jnp.maximum(sig, t)

    def accumulate(mask):
        # (block_rows,128) -> (block_rows//8, 8, 128) -> sum over axis 0:
        # pure vreg-wise VPU adds, no per-step XLU tree reduction.
        num = jnp.where(mask, mn, 0.0).reshape(-1, SUBL, LANE).sum(axis=0)
        den = jnp.where(mask, mx, 0.0).reshape(-1, SUBL, LANE).sum(axis=0)
        out_ref[0] += num
        out_ref[1] += den

    # Interior blocks: only the ignore_target mask (no index math).
    @pl.when(is_real & jnp.logical_not(is_last_real))
    def _():
        accumulate(keep)

    # Last real block: additionally mask the padded / ragged tail.
    @pl.when(is_last_real)
    def _():
        row = lax.broadcasted_iota(jnp.int32, x.shape, 0)
        col = lax.broadcasted_iota(jnp.int32, x.shape, 1)
        gidx = b * (block_rows * LANE) + row * LANE + col
        accumulate(keep & (gidx < n_valid))


def dice_loss(logits, target, *, ignore_target=-1,
              max_block_rows=4096, num_cores=2):
    """Pallas implementation of DiceLoss.forward(input, target).

    Targets are assumed integer-valued ({0, 1} plus ignore_target), matching
    the PyTorch module's contract.
    """
    x = logits.reshape(-1)
    if x.dtype not in (jnp.float32, jnp.bfloat16):
        x = x.astype(jnp.float32)
    t = target.reshape(-1).astype(jnp.int32)    # no-op copy if already int32
    n = x.shape[0]

    # Pad only up to a whole (8,128) vreg tile (no-op when already aligned).
    tile = SUBL * LANE
    padded = ((n + tile - 1) // tile) * tile
    if padded != n:
        x = jnp.pad(x, (0, padded - n))
        t = jnp.pad(t, (0, padded - n), constant_values=int(ignore_target))

    rows = padded // LANE                        # multiple of 8
    block_rows = max(SUBL, (min(max_block_rows, rows) // SUBL) * SUBL)
    num_blocks = pl.cdiv(rows, block_rows)
    nc = num_cores
    bpc = pl.cdiv(num_blocks, nc)                # blocks per core

    x2 = x.reshape(rows, LANE)                   # free (contiguous) reshape
    t2 = t.reshape(rows, LANE)

    def in_map(c, j):
        # Clamp overrun (c,j) cells to the last real block; the kernel skips
        # their accumulation via is_real, so the duplicate DMA is harmless.
        return (jnp.minimum(c * bpc + j, num_blocks - 1), 0)

    kernel = functools.partial(
        _dice_loss_kernel,
        n_valid=n,
        ignore_target=int(ignore_target),
        block_rows=block_rows,
        blocks_per_core=bpc,
        num_blocks=num_blocks,
    )

    partials = pl.pallas_call(
        kernel,
        out_shape=jax.ShapeDtypeStruct((2 * nc, SUBL, LANE), jnp.float32),
        grid_spec=pltpu.PrefetchScalarGridSpec(
            num_scalar_prefetch=0,
            grid=(nc, bpc),
            in_specs=[
                pl.BlockSpec((block_rows, LANE), in_map),
                pl.BlockSpec((block_rows, LANE), in_map),
            ],
            out_specs=pl.BlockSpec((2, SUBL, LANE), lambda c, j: (c, 0, 0)),
        ),
        compiler_params=pltpu.CompilerParams(
            dimension_semantics=("parallel", "arbitrary")),
    )(x2, t2)

    # Tiny final combine (2*nc*8*128 floats) in plain JAX.
    partials = partials.reshape(nc, 2, SUBL, LANE)
    num = jnp.sum(partials[:, 0])
    den = jnp.maximum(jnp.sum(partials[:, 1]), 1.0)   # torch.clamp(min=1.0)
    return 1.0 - num / den


def dice_loss_ref(logits, target, ignore_target=-1):
    """Pure-JAX reference mirroring the PyTorch forward."""
    x = jax.nn.sigmoid(logits.reshape(-1).astype(jnp.float32))
    t = target.reshape(-1).astype(jnp.float32)
    mask = (t != ignore_target).astype(jnp.float32)
    num = jnp.sum(jnp.minimum(x, t) * mask)
    den = jnp.maximum(jnp.sum(jnp.maximum(x, t) * mask), 1.0)
    return 1.0 - num / den


if __name__ == "__main__":
    key = jax.random.PRNGKey(0)
    k_x, k_t, k_ign, k_x2, k_t2 = jax.random.split(key, 5)

    # --- main case: flattened logits for 2*4*16*16 points (N = 2048) --------
    N = 2048
    logits = jax.random.normal(k_x, (N,), dtype=jnp.float32)
    target = jax.random.bernoulli(k_t, 0.5, (N,)).astype(jnp.int32)
    ignore = jax.random.bernoulli(k_ign, 0.1, (N,))
    target = jnp.where(ignore, -1, target)

    loss = jax.block_until_ready(dice_loss(logits, target, ignore_target=-1))
    ref = dice_loss_ref(logits, target, ignore_target=-1)
    assert jnp.allclose(loss, ref, atol=1e-5, rtol=1e-5), (loss, ref)

    # --- ragged / multi-block case: N not a multiple of 8*128, tiny blocks
    #     to exercise padding mask, ragged last block, and the 2-way split ----
    N2 = 3000
    logits2 = jax.random.normal(k_x2, (N2,), dtype=jnp.float32)
    target2 = jax.random.bernoulli(k_t2, 0.5, (N2,)).astype(jnp.int32)
    loss2 = jax.block_until_ready(
        dice_loss(logits2, target2, ignore_target=-1, max_block_rows=8))
    ref2 = dice_loss_ref(logits2, target2, ignore_target=-1)
    assert jnp.allclose(loss2, ref2, atol=1e-5, rtol=1e-5), (loss2, ref2)

    print("KERNEL_OK")
</pallas_src>

<mosaic_0001>
module attributes {stable_mosaic.version = 11 : i64} {
  func.func @_dice_loss_kernel(%arg0: i32, %arg1: i32, %arg2: memref<16x128xf32, #tpu.memory_space<vmem>>, %arg3: memref<16x128xi32, #tpu.memory_space<vmem>>, %arg4: memref<2x8x128xf32, #tpu.memory_space<vmem>>) attributes {dimension_semantics = [#tpu.dimension_semantics<parallel>, #tpu.dimension_semantics<arbitrary>], iteration_bounds = array<i64: 2, 1>, scalar_prefetch = 0 : i64, scratch_operands = 0 : i64, tpu.core_type = #tpu.core_type<tc>, window_params = [{transform_indices = @transform_0, window_bounds = array<i64: 16, 128>}, {transform_indices = @transform_1, window_bounds = array<i64: 16, 128>}, {transform_indices = @transform_2, window_bounds = array<i64: 2, 8, 128>}]} {
    %c0_i32 = arith.constant 0 : i32
    %0 = arith.cmpi eq, %arg1, %c0_i32 : i32
    %1 = arith.extui %0 : i1 to i32
    %c0_i32_0 = arith.constant 0 : i32
    %2 = arith.cmpi ne, %1, %c0_i32_0 : i32
    scf.if %2 {
      %cst_10 = arith.constant 0.000000e+00 : f32
      %27 = vector.broadcast %cst_10 : f32 to vector<2x8x128xf32>
      %c0_11 = arith.constant 0 : index
      %c0_12 = arith.constant 0 : index
      %c0_13 = arith.constant 0 : index
      %28 = vector.load %arg4[%c0_11, %c0_12, %c0_13] : memref<2x8x128xf32, #tpu.memory_space<vmem>>, vector<2x8x128xf32>
      tpu.vector_store %arg4[%c0_11, %c0_12, %c0_13], %27 {strides = array<i32>} : memref<2x8x128xf32, #tpu.memory_space<vmem>>, vector<2x8x128xf32>,
    } else {
    }
    %c1_i32 = arith.constant 1 : i32
    %3 = arith.muli %arg0, %c1_i32 : i32
    %4 = arith.addi %3, %arg1 : i32
    %c1_i32_1 = arith.constant 1 : i32
    %5 = arith.cmpi slt, %4, %c1_i32_1 : i32
    %c0_i32_2 = arith.constant 0 : i32
    %6 = arith.cmpi eq, %4, %c0_i32_2 : i32
    %c0 = arith.constant 0 : index
    %c0_3 = arith.constant 0 : index
    %7 = vector.load %arg2[%c0, %c0_3] : memref<16x128xf32, #tpu.memory_space<vmem>>, vector<16x128xf32>
    %c0_4 = arith.constant 0 : index
    %c0_5 = arith.constant 0 : index
    %8 = vector.load %arg3[%c0_4, %c0_5] : memref<16x128xi32, #tpu.memory_space<vmem>>, vector<16x128xi32>
    %9 = arith.sitofp %8 : vector<16x128xi32> to vector<16x128xf32>
    %cst = arith.constant 5.000000e-01 : f32
    %10 = vector.broadcast %cst : f32 to vector<16x128xf32>
    %11 = arith.mulf %10, %7 : vector<16x128xf32>
    %12 = math.tanh %11 : vector<16x128xf32>
    %cst_6 = arith.constant 5.000000e-01 : f32
    %13 = vector.broadcast %cst_6 : f32 to vector<16x128xf32>
    %14 = arith.mulf %13, %12 : vector<16x128xf32>
    %cst_7 = arith.constant 5.000000e-01 : f32
    %15 = vector.broadcast %cst_7 : f32 to vector<16x128xf32>
    %16 = arith.addf %14, %15 : vector<16x128xf32>
    %c-1_i32 = arith.constant -1 : i32
    %17 = vector.broadcast %c-1_i32 : i32 to vector<16x128xi32>
    %18 = arith.cmpi ne, %8, %17 : vector<16x128xi32>
    %19 = arith.minimumf %16, %9 : vector<16x128xf32>
    %20 = arith.maximumf %16, %9 : vector<16x128xf32>
    %true = arith.constant true
    %21 = arith.xori %6, %true : i1
    %22 = arith.andi %5, %21 : i1
    %23 = arith.extui %22 : i1 to i32
    %c0_i32_8 = arith.constant 0 : i32
    %24 = arith.cmpi ne, %23, %c0_i32_8 : i32
    scf.if %24 {
      %cst_10 = arith.constant 0.000000e+00 : f32
      %27 = vector.broadcast %cst_10 : f32 to vector<16x128xf32>
      %28 = arith.select %18, %19, %27 : vector<16x128xi1>, vector<16x128xf32>
      %29 = vector.shape_cast %28 : vector<16x128xf32> to vector<2x8x128xf32>
      %cst_11 = arith.constant dense<0.000000e+00> : vector<8x128xf32>
      %30 = vector.multi_reduction <add>, %29, %cst_11 [0] : vector<2x8x128xf32> to vector<8x128xf32>
      %cst_12 = arith.constant 0.000000e+00 : f32
      %31 = vector.broadcast %cst_12 : f32 to vector<16x128xf32>
      %32 = arith.select %18, %20, %31 : vector<16x128xi1>, vector<16x128xf32>
      %33 = vector.shape_cast %32 : vector<16x128xf32> to vector<2x8x128xf32>
      %cst_13 = arith.constant dense<0.000000e+00> : vector<8x128xf32>
      %34 = vector.multi_reduction <add>, %33, %cst_13 [0] : vector<2x8x128xf32> to vector<8x128xf32>
      %c0_14 = arith.constant 0 : index
      %c0_15 = arith.constant 0 : index
      %c0_16 = arith.constant 0 : index
      %35 = vector.load %arg4[%c0_14, %c0_15, %c0_16] : memref<2x8x128xf32, #tpu.memory_space<vmem>>, vector<1x8x128xf32>
      %36 = vector.shape_cast %35 : vector<1x8x128xf32> to vector<8x128xf32>
      %37 = arith.addf %36, %30 : vector<8x128xf32>
      %c0_17 = arith.constant 0 : index
      %c0_18 = arith.constant 0 : index
      %c0_19 = arith.constant 0 : index
      %38 = vector.load %arg4[%c0_17, %c0_18, %c0_19] : memref<2x8x128xf32, #tpu.memory_space<vmem>>, vector<1x8x128xf32>
      %39 = vector.shape_cast %38 : vector<1x8x128xf32> to vector<8x128xf32>
      %40 = vector.shape_cast %37 : vector<8x128xf32> to vector<1x8x128xf32>
      tpu.vector_store %arg4[%c0_17, %c0_18, %c0_19], %40 {strides = array<i32>} : memref<2x8x128xf32, #tpu.memory_space<vmem>>, vector<1x8x128xf32>,
      %c1 = arith.constant 1 : index
      %c0_20 = arith.constant 0 : index
      %c0_21 = arith.constant 0 : index
      %41 = vector.load %arg4[%c1, %c0_20, %c0_21] : memref<2x8x128xf32, #tpu.memory_space<vmem>>, vector<1x8x128xf32>
      %42 = vector.shape_cast %41 : vector<1x8x128xf32> to vector<8x128xf32>
      %43 = arith.addf %42, %34 : vector<8x128xf32>
      %c1_22 = arith.constant 1 : index
      %c0_23 = arith.constant 0 : index
      %c0_24 = arith.constant 0 : index
      %44 = vector.load %arg4[%c1_22, %c0_23, %c0_24] : memref<2x8x128xf32, #tpu.memory_space<vmem>>, vector<1x8x128xf32>
      %45 = vector.shape_cast %44 : vector<1x8x128xf32> to vector<8x128xf32>
      %46 = vector.shape_cast %43 : vector<8x128xf32> to vector<1x8x128xf32>
      tpu.vector_store %arg4[%c1_22, %c0_23, %c0_24], %46 {strides = array<i32>} : memref<2x8x128xf32, #tpu.memory_space<vmem>>, vector<1x8x128xf32>,
    } else {
    }
    %25 = arith.extui %6 : i1 to i32
    %c0_i32_9 = arith.constant 0 : i32
    %26 = arith.cmpi ne, %25, %c0_i32_9 : i32
    scf.if %26 {
      %27 = tpu.iota {dimensions = array<i32: 0>} : vector<16x128xi32>
      %28 = tpu.iota {dimensions = array<i32: 1>} : vector<16x128xi32>
      %c2048_i32 = arith.constant 2048 : i32
      %29 = arith.muli %4, %c2048_i32 : i32
      %c128_i32 = arith.constant 128 : i32
      %30 = vector.broadcast %c128_i32 : i32 to vector<16x128xi32>
      %31 = arith.muli %27, %30 : vector<16x128xi32>
      %32 = vector.broadcast %29 : i32 to vector<16x128xi32>
      %33 = arith.addi %32, %31 : vector<16x128xi32>
      %34 = arith.addi %33, %28 : vector<16x128xi32>
      %c2048_i32_10 = arith.constant 2048 : i32
      %35 = vector.broadcast %c2048_i32_10 : i32 to vector<16x128xi32>
      %36 = arith.cmpi slt, %34, %35 : vector<16x128xi32>
      %37 = arith.andi %18, %36 : vector<16x128xi1>
      %cst_11 = arith.constant 0.000000e+00 : f32
      %38 = vector.broadcast %cst_11 : f32 to vector<16x128xf32>
      %39 = arith.select %37, %19, %38 : vector<16x128xi1>, vector<16x128xf32>
      %40 = vector.shape_cast %39 : vector<16x128xf32> to vector<2x8x128xf32>
      %cst_12 = arith.constant dense<0.000000e+00> : vector<8x128xf32>
      %41 = vector.multi_reduction <add>, %40, %cst_12 [0] : vector<2x8x128xf32> to vector<8x128xf32>
      %cst_13 = arith.constant 0.000000e+00 : f32
      %42 = vector.broadcast %cst_13 : f32 to vector<16x128xf32>
      %43 = arith.select %37, %20, %42 : vector<16x128xi1>, vector<16x128xf32>
      %44 = vector.shape_cast %43 : vector<16x128xf32> to vector<2x8x128xf32>
      %cst_14 = arith.constant dense<0.000000e+00> : vector<8x128xf32>
      %45 = vector.multi_reduction <add>, %44, %cst_14 [0] : vector<2x8x128xf32> to vector<8x128xf32>
      %c0_15 = arith.constant 0 : index
      %c0_16 = arith.constant 0 : index
      %c0_17 = arith.constant 0 : index
      %46 = vector.load %arg4[%c0_15, %c0_16, %c0_17] : memref<2x8x128xf32, #tpu.memory_space<vmem>>, vector<1x8x128xf32>
      %47 = vector.shape_cast %46 : vector<1x8x128xf32> to vector<8x128xf32>
      %48 = arith.addf %47, %41 : vector<8x128xf32>
      %c0_18 = arith.constant 0 : index
      %c0_19 = arith.constant 0 : index
      %c0_20 = arith.constant 0 : index
      %49 = vector.load %arg4[%c0_18, %c0_19, %c0_20] : memref<2x8x128xf32, #tpu.memory_space<vmem>>, vector<1x8x128xf32>
      %50 = vector.shape_cast %49 : vector<1x8x128xf32> to vector<8x128xf32>
      %51 = vector.shape_cast %48 : vector<8x128xf32> to vector<1x8x128xf32>
      tpu.vector_store %arg4[%c0_18, %c0_19, %c0_20], %51 {strides = array<i32>} : memref<2x8x128xf32, #tpu.memory_space<vmem>>, vector<1x8x128xf32>,
      %c1 = arith.constant 1 : index
      %c0_21 = arith.constant 0 : index
      %c0_22 = arith.constant 0 : index
      %52 = vector.load %arg4[%c1, %c0_21, %c0_22] : memref<2x8x128xf32, #tpu.memory_space<vmem>>, vector<1x8x128xf32>
      %53 = vector.shape_cast %52 : vector<1x8x128xf32> to vector<8x128xf32>
      %54 = arith.addf %53, %45 : vector<8x128xf32>
      %c1_23 = arith.constant 1 : index
      %c0_24 = arith.constant 0 : index
      %c0_25 = arith.constant 0 : index
      %55 = vector.load %arg4[%c1_23, %c0_24, %c0_25] : memref<2x8x128xf32, #tpu.memory_space<vmem>>, vector<1x8x128xf32>
      %56 = vector.shape_cast %55 : vector<1x8x128xf32> to vector<8x128xf32>
      %57 = vector.shape_cast %54 : vector<8x128xf32> to vector<1x8x128xf32>
      tpu.vector_store %arg4[%c1_23, %c0_24, %c0_25], %57 {strides = array<i32>} : memref<2x8x128xf32, #tpu.memory_space<vmem>>, vector<1x8x128xf32>,
    } else {
    }
    return
  }
  func.func @transform_0(%arg0: i32, %arg1: i32) -> (i32, i32) {
    %c1_i32 = arith.constant 1 : i32
    %0 = arith.muli %arg0, %c1_i32 : i32
    %1 = arith.addi %0, %arg1 : i32
    %c0_i32 = arith.constant 0 : i32
    %2 = arith.minsi %1, %c0_i32 : i32
    %c0_i32_0 = arith.constant 0 : i32
    %c0_i32_1 = arith.constant 0 : i32
    return %2, %c0_i32_0 : i32, i32
  }
  func.func @transform_1(%arg0: i32, %arg1: i32) -> (i32, i32) {
    %c1_i32 = arith.constant 1 : i32
    %0 = arith.muli %arg0, %c1_i32 : i32
    %1 = arith.addi %0, %arg1 : i32
    %c0_i32 = arith.constant 0 : i32
    %2 = arith.minsi %1, %c0_i32 : i32
    %c0_i32_0 = arith.constant 0 : i32
    %c0_i32_1 = arith.constant 0 : i32
    return %2, %c0_i32_0 : i32, i32
  }
  func.func @transform_2(%arg0: i32, %arg1: i32) -> (i32, i32, i32) {
    %c0_i32 = arith.constant 0 : i32
    %c0_i32_0 = arith.constant 0 : i32
    %c0_i32_1 = arith.constant 0 : i32
    return %arg0, %c0_i32, %c0_i32_0 : i32, i32, i32
  }
}

</mosaic_0001>

<llo_original>
// kernel: tpu_custom_call.1
$region0: #{tpu_custom_call.1}
  #allocation0 [shape = 'u32[]', space=smem, size = 0x4, offset = 0x4, fixed_abs, tag = 'smem constant byte address 0x4 - core index']
  #allocation1 [shape = 'u32[144,128]{1,0:T(1,128)}', space=vmem, size = 0x12000, scoped, tag = 'internal scratch']
  %s0 = inlined_call_operand.hbm [shape: f32[16,128], index: 0, kind: input, shape index: {}]
  %s1 = inlined_call_operand.hbm [shape: s32[16,128], index: 1, kind: input, shape index: {}]
  %s2 = inlined_call_operand.hbm [shape: f32[4,8,128], index: 2, kind: output, shape index: {}]
  %s3 = sld [smem:[#allocation0]]
  $region61: #{tpu_custom_call.1} parent=0
    _
  %s5 = ssub.s32 1, %s3
  %s6 = scalar_select 0, %s5, %s3
  $region1: #{tpu_custom_call.1} parent=0
    #allocation2 [shape = 'u8[16384]{0}', space=vmem, size = 0x4000, scoped, tag = 'input window, operand 0']
    #allocation3 [shape = 's32[2]{0}', space=sflag, size = 0x8, scoped, tag = 'scoped memory for tpu_custom_call.1']
    #allocation4 [shape = 's32[2]{0}', space=sflag, size = 0x8, scoped, tag = 'scoped memory for tpu_custom_call.1']
    #allocation5 [shape = 'u8[16384]{0}', space=vmem, size = 0x4000, scoped, tag = 'input window, operand 1']
    #allocation6 [shape = 's32[2]{0}', space=sflag, size = 0x8, scoped, tag = 'scoped memory for tpu_custom_call.1']
    #allocation7 [shape = 'u8[16384]{0}', space=vmem, size = 0x4000, scoped, tag = 'output window, operand 0']
    %7 = vsyncpa [#allocation3], 0
    %s8 = scalar_lea.sflag [#allocation3], 1
    %9 = vsyncpa %s8, 0
    %10 = vsyncpa [#allocation6], 0
    %s11 = scalar_lea.sflag [#allocation6], 1
    %12 = vsyncpa %s11, 0
    %13 = vsyncpa [#allocation4], 0
    %s14 = scalar_lea.sflag [#allocation4], 1
    %15 = vsyncpa %s14, 0
    loop: start=0, step=1, limit=4
    $region2: #{tpu_custom_call.1} parent=1 // loop_pre_header
      _
    $region3: #{tpu_custom_call.1} parent=1 // loop_header
      %s17 = sphi 0, %s21
      %p18 = scmp.ge.s32.totalorder %s17, 4
      %s24 = sphi 0, %s36
      %s25 = sphi 0, %s32
      %s26 = sphi 0, %s24
      %s27 = sphi 0, %s25
      %s28 = sphi 0, %s26
      %s29 = sphi 0, %s27
      %s45 = sphi 0, %s47
      %s48 = sphi 0, %s45
      %s49 = sphi 0, %s48
      %s65 = sphi 0, %s49
      %s77 = sphi 0, %s79
      %s80 = sphi 0, %s77
      %s81 = sphi 0, %s80
      %s97 = sphi 0, %s81
      %s103 = sphi 0, %s105
      %s106 = sphi 0, %s103
      %s107 = sphi 0, %s106
      %s123 = sphi 0, %s107
    $region4: #{tpu_custom_call.1} parent=1 // loop_header_branch
      %20 = sbr.rel (%p18) target = $region8
    $region5: #{tpu_custom_call.1} parent=1 // loop_body
      %s22 = ssub.s32 %s17, 1
      %s23 = ssub.s32 %s17, 2
      %s30 = sadd.s32 1, %s25
      %p31 = scmp.ge.s32.totalorder %s30, 1
      %s32 = scalar_select %p31, 0, %s30
      %s33 = sadd.s32 1, %s24
      %s34 = scalar_select %p31, %s33, %s24
      %p35 = scmp.ge.s32.totalorder %s34, 2
      %s36 = scalar_select %p35, 0, %s34
      %s37 = sadd.s32 %s24, %s25
      %p38 = scmp.lt.s32.totalorder %s37, 0
      %s39 = scalar_select %p38, %s37, 0
      %s40 = sadd.s32 %s36, %s32
      %p41 = scmp.lt.s32.totalorder %s40, 0
      %s42 = scalar_select %p41, %s40, 0
      %s43 = ssub.s32 %s39, %s42
      %p44 = scmp.eq.s32.totalorder %s43, 0
      %s46 = sadd.s32 %s45, 1
      %s47 = scalar_select %p44, %s45, %s46
      %p50 = pneg %p44
      %p51 = scmp.eq.s32.totalorder %s17, 1
      %p52 = por %p50, %p51
      %p53 = scmp.ne.s32.totalorder %s45, %s48
      %p54 = scmp.eq.s32.totalorder %s17, 0
      %p55 = por %p53, %p54
      %p56 = scmp.ne.s32.totalorder %s45, %s48
      %p57 = scmp.eq.s32.totalorder %s22, 1
      %p58 = por %p56, %p57
      %p59 = scmp.ne.s32.totalorder %s48, %s49
      %p60 = scmp.eq.s32.totalorder %s22, 0
      %p61 = por %p59, %p60
      %p62 = scmp.ne.s32.totalorder %s48, %s49
      %p63 = scmp.eq.s32.totalorder %s23, 1
      %p64 = por %p62, %p63
      %p66 = scmp.ne.s32.totalorder %s49, %s65
      %p67 = scmp.eq.s32.totalorder %s23, 0
      %p68 = por %p66, %p67
      %s69 = sadd.s32 %s24, %s25
      %p70 = scmp.lt.s32.totalorder %s69, 0
      %s71 = scalar_select %p70, %s69, 0
      %s72 = sadd.s32 %s36, %s32
      %p73 = scmp.lt.s32.totalorder %s72, 0
      %s74 = scalar_select %p73, %s72, 0
      %s75 = ssub.s32 %s71, %s74
      %p76 = scmp.eq.s32.totalorder %s75, 0
      %s78 = sadd.s32 %s77, 1
      %s79 = scalar_select %p76, %s77, %s78
      %p82 = pneg %p76
      %p83 = scmp.eq.s32.totalorder %s17, 1
      %p84 = por %p82, %p83
      %p85 = scmp.ne.s32.totalorder %s77, %s80
      %p86 = scmp.eq.s32.totalorder %s17, 0
      %p87 = por %p85, %p86
      %p88 = scmp.ne.s32.totalorder %s77, %s80
      %p89 = scmp.eq.s32.totalorder %s22, 1
      %p90 = por %p88, %p89
      %p91 = scmp.ne.s32.totalorder %s80, %s81
      %p92 = scmp.eq.s32.totalorder %s22, 0
      %p93 = por %p91, %p92
      %p94 = scmp.ne.s32.totalorder %s80, %s81
      %p95 = scmp.eq.s32.totalorder %s23, 1
      %p96 = por %p94, %p95
      %p98 = scmp.ne.s32.totalorder %s81, %s97
      %p99 = scmp.eq.s32.totalorder %s23, 0
      %p100 = por %p98, %p99
      %s101 = ssub.s32 %s24, %s36
      %p102 = scmp.eq.s32.totalorder %s101, 0
      %s104 = sadd.s32 %s103, 1
      %s105 = scalar_select %p102, %s103, %s104
      %p108 = pneg %p102
      %p109 = scmp.eq.s32.totalorder %s17, 1
      %p110 = por %p108, %p109
      %p111 = scmp.ne.s32.totalorder %s103, %s106
      %p112 = scmp.eq.s32.totalorder %s17, 0
      %p113 = por %p111, %p112
      %p114 = scmp.ne.s32.totalorder %s103, %s106
      %p115 = scmp.eq.s32.totalorder %s22, 1
      %p116 = por %p114, %p115
      %p117 = scmp.ne.s32.totalorder %s106, %s107
      %p118 = scmp.eq.s32.totalorder %s22, 0
      %p119 = por %p117, %p118
      %p120 = scmp.ne.s32.totalorder %s106, %s107
      %p121 = scmp.eq.s32.totalorder %s23, 1
      %p122 = por %p120, %p121
      %p124 = scmp.ne.s32.totalorder %s107, %s123
      %p125 = scmp.eq.s32.totalorder %s23, 0
      %p126 = por %p124, %p125
      %p127 = scmp.le.s32.totalorder 1, %s17
      %p128 = scmp.lt.s32.totalorder %s17, 3
      %p129 = pnand %p127, %p128
      %p130 = pneg %p129
      // Predicated region
      $region9: #{tpu_custom_call.1} parent=5 // pred_check
        _
      $region10: #{tpu_custom_call.1} parent=5 // pred_check_branch
        %132 = sbr.rel (%p129) target = $region12
      $region11: #{tpu_custom_call.1} parent=5 // pred_region
        %s133 = ssub.s32 %s17, 1
      $region12: #{tpu_custom_call.1} parent=5 // pred_fallthru
        _
      %p134 = scmp.lt.s32.totalorder %s17, 2
      // Predicated region
      $region13: #{tpu_custom_call.1} parent=5 // pred_check
        %p135 = pneg %p134
      $region14: #{tpu_custom_call.1} parent=5 // pred_check_branch
        %137 = sbr.rel (%p135) target = $region16
      $region15: #{tpu_custom_call.1} parent=5 // pred_region
        // Predicated region
        $region17: #{tpu_custom_call.1} parent=15 // pred_check
          %p138 = pneg %p55
        $region18: #{tpu_custom_call.1} parent=15 // pred_check_branch
          %140 = sbr.rel (%p138) target = $region20
        $region19: #{tpu_custom_call.1} parent=15 // pred_region
          %s141 = sand.u32 %s45, 1
          %s142 = scalar_lea.sflag [#allocation3], %s141
          %s143 = sand.u32 %s45, 1
          %s144 = smul.addr %s143, 16
          %s145 = scalar_lea.vmem [#allocation2], %s144
          %s146 = sadd.s32 %s24, %s25
          %p147 = scmp.lt.s32.totalorder %s146, 0
          %s148 = scalar_select %p147, %s146, 0
          %s149 = smul.u32 2, %s148
          %s151 = ssub.s32 256, 256
          %152 = vsyncadd %s142, %s151
          %s153 = smul.addr %s149, 128
          %s154 = scalar_lea.hbm %s0, %s153
          %s155 = sshll.u32 %s145, 4
          %s156 = int_to_ptr.vmem [resolvable:$true] %s155
          %161 = dma.hbm_to_vmem [thread:$0]  %s154, 256, %s156, %s142, 128, 128, 8
        $region20: #{tpu_custom_call.1} parent=15 // pred_fallthru
          _
        // Predicated region
        $region21: #{tpu_custom_call.1} parent=15 // pred_check
          %p162 = pneg %p87
        $region22: #{tpu_custom_call.1} parent=15 // pred_check_branch
          %164 = sbr.rel (%p162) target = $region24
        $region23: #{tpu_custom_call.1} parent=15 // pred_region
          %s165 = sand.u32 %s77, 1
          %s166 = scalar_lea.sflag [#allocation6], %s165
          %s167 = sand.u32 %s77, 1
          %s168 = smul.addr %s167, 16
          %s169 = scalar_lea.vmem [#allocation5], %s168
          %s170 = sadd.s32 %s24, %s25
          %p171 = scmp.lt.s32.totalorder %s170, 0
          %s172 = scalar_select %p171, %s170, 0
          %s173 = smul.u32 2, %s172
          %s175 = ssub.s32 256, 256
          %176 = vsyncadd %s166, %s175
          %s177 = smul.addr %s173, 128
          %s178 = scalar_lea.hbm %s1, %s177
          %s179 = sshll.u32 %s169, 4
          %s180 = int_to_ptr.vmem [resolvable:$true] %s179
          %185 = dma.hbm_to_vmem [thread:$0]  %s178, 256, %s180, %s166, 128, 128, 8
        $region24: #{tpu_custom_call.1} parent=15 // pred_fallthru
          _
      $region16: #{tpu_custom_call.1} parent=5 // pred_fallthru
        _
      %p186 = scmp.le.s32.totalorder 1, %s17
      %p187 = scmp.lt.s32.totalorder %s17, 3
      %p188 = pnand %p186, %p187
      %p189 = pneg %p188
      // Predicated region
      $region25: #{tpu_custom_call.1} parent=5 // pred_check
        _
      $region26: #{tpu_custom_call.1} parent=5 // pred_check_branch
        %191 = sbr.rel (%p188) target = $region28
      $region27: #{tpu_custom_call.1} parent=5 // pred_region
        %s192 = ssub.s32 %s17, 1
        %s193 = sand.u32 %s48, 1
        %s194 = scalar_lea.sflag [#allocation3], %s193
        %s195 = sand.u32 %s48, 1
        %s196 = smul.addr %s195, 16
        %s197 = scalar_lea.vmem [#allocation2], %s196
        // Predicated region
        $region29: #{tpu_custom_call.1} parent=27 // pred_check
          %p198 = pneg %p61
        $region30: #{tpu_custom_call.1} parent=27 // pred_check_branch
          %200 = sbr.rel (%p198) target = $region32
        $region31: #{tpu_custom_call.1} parent=27 // pred_region
          %201 = dma.done %s194, 256
        $region32: #{tpu_custom_call.1} parent=27 // pred_fallthru
          _
        %s202 = sand.u32 %s80, 1
        %s203 = scalar_lea.sflag [#allocation6], %s202
        %s204 = sand.u32 %s80, 1
        %s205 = smul.addr %s204, 16
        %s206 = scalar_lea.vmem [#allocation5], %s205
        // Predicated region
        $region33: #{tpu_custom_call.1} parent=27 // pred_check
          %p207 = pneg %p93
        $region34: #{tpu_custom_call.1} parent=27 // pred_check_branch
          %209 = sbr.rel (%p207) target = $region36
        $region35: #{tpu_custom_call.1} parent=27 // pred_region
          %210 = dma.done %s203, 256
        $region36: #{tpu_custom_call.1} parent=27 // pred_fallthru
          _
        %s211 = sand.u32 %s48, 1
        %s212 = scalar_lea.sflag [#allocation3], %s211
        %s213 = sand.u32 %s48, 1
        %s214 = smul.addr %s213, 16
        %s215 = scalar_lea.vmem [#allocation2], %s214
        %p216 = pneg %p61
        %p217 = pneg %p58
        %s218 = sand.u32 %s80, 1
        %s219 = scalar_lea.sflag [#allocation6], %s218
        %s220 = sand.u32 %s80, 1
        %s221 = smul.addr %s220, 16
        %s222 = scalar_lea.vmem [#allocation5], %s221
        %p223 = pneg %p93
        %p224 = pneg %p90
        %p225 = pneg %p119
        %p226 = pneg %p116
        %s227 = sand.u32 %s106, 1
        %s228 = scalar_lea.sflag [#allocation4], %s227
        %s229 = sand.u32 %s106, 1
        %s230 = smul.addr %s229, 16
        %s231 = scalar_lea.vmem [#allocation7], %s230
        %s232 = sadd.s32 %s26, %s27
        %p233 = scmp.lt.s32.totalorder %s232, 0
        %s234 = scalar_select %p233, %s232, 0
        %s235 = smul.u32 2, %s234
        %s236 = sadd.s32 %s26, %s27
        %p237 = scmp.lt.s32.totalorder %s236, 0
        %s238 = scalar_select %p237, %s236, 0
        %s239 = smul.u32 2, %s238
        %s240 = smul.u32 2, %s26
        %p241 = scmp.eq.s32.totalorder %s27, 0
        // Predicated region
        $region37: #{tpu_custom_call.1} parent=27 // pred_check
          %p242 = pneg %p241
        $region38: #{tpu_custom_call.1} parent=27 // pred_check_branch
          %244 = sbr.rel (%p242) target = $region40
        $region39: #{tpu_custom_call.1} parent=27 // pred_region
          %245 = vst [vmem:[%s231] sm:$0xff] 0.0
          %246 = vst [vmem:[%s231 + $0x8] sm:$0xff] 0.0
        $region40: #{tpu_custom_call.1} parent=27 // pred_fallthru
          _
        %s247 = sadd.s32 %s26, %s27
        %p248 = scmp.lt.s32.totalorder %s247, 1
        %p249 = scmp.eq.s32.totalorder %s247, 0
        %v250 = vld [vmem:[%s197] sm:$0xff]
        %v251 = vld [vmem:[%s197 + $0x8] sm:$0xff]
        %v252 = vld [vmem:[%s206] sm:$0xff]
        %v253 = vld [vmem:[%s206 + $0x8] sm:$0xff]
        %v254 = vcvt.s32.f32 %v252
        %v255 = vcvt.s32.f32 %v253
        %v256 = vmul.f32 %v250, 0.5
        %v257 = vmul.f32 %v251, 0.5
        %v258 = vtanh.pop %v256
        %v259 = vtanh.pop %v257
        %v260 = vmul.f32 %v258, 0.5
        %v261 = vmul.f32 %v259, 0.5
        %v262 = vadd.f32 %v260, 0.5
        %v263 = vadd.f32 %v261, 0.5
        %vm264 = vcmp.ne.s32.totalorder %v252, 4294967295
        %vm265 = vcmp.ne.s32.totalorder %v253, 4294967295
        %v266 = vmin.f32 %v262, %v254
        %v267 = vmin.f32 %v263, %v255
        %v268 = vmax.f32 %v262, %v254
        %v269 = vmax.f32 %v263, %v255
        %p270 = scmp.ne.s32.totalorder %s247, 0
        %p271 = pnand %p248, %p270
        %p272 = pneg %p271
        // Predicated region
        $region41: #{tpu_custom_call.1} parent=27 // pred_check
          _
        $region42: #{tpu_custom_call.1} parent=27 // pred_check_branch
          %274 = sbr.rel (%p271) target = $region44
        $region43: #{tpu_custom_call.1} parent=27 // pred_region
          %v275 = vsel %vm264, %v266, 0.0
          %v276 = vsel %vm265, %v267, 0.0
          %v277 = vadd.f32 %v275, %v276
          %v278 = vsel %vm264, %v268, 0.0
          %v279 = vsel %vm265, %v269, 0.0
          %v280 = vadd.f32 %v278, %v279
          %v281 = vld [vmem:[%s231] sm:$0xff]
          %v282 = vadd.f32 %v281, %v277
          %283 = vst [vmem:[%s231] sm:$0xff] %v282
          %s284 = scalar_lea.vmem %s231, 8 [#allocation7]
          %v285 = vld [vmem:[%s284] sm:$0xff]
          %v286 = vadd.f32 %v285, %v280
          %287 = vst [vmem:[%s284] sm:$0xff] %v286
        $region44: #{tpu_custom_call.1} parent=27 // pred_fallthru
          _
        // Predicated region
        $region45: #{tpu_custom_call.1} parent=27 // pred_check
          %p288 = pneg %p249
        $region46: #{tpu_custom_call.1} parent=27 // pred_check_branch
          %290 = sbr.rel (%p288) target = $region48
        $region47: #{tpu_custom_call.1} parent=27 // pred_region
          %v291 = vlaneseq
          %v292 = vshrl.u32 %v291, 7
          %v293 = vadd.s32 %v292, 8
          %v294 = vlaneseq
          %v295 = vand.u32 %v294, 127
          %s296 = smul.u32 %s247, 2048
          %v297 = vmul.u32 %v292, 128
          %v298 = vmul.u32 %v293, 128
          %v299 = vstv %s296
          %v300 = vadd.s32 %v299, %v297
          %v301 = vadd.s32 %v299, %v298
          %v302 = vadd.s32 %v300, %v295
          %v303 = vadd.s32 %v301, %v295
          %vm304 = vcmp.lt.s32.totalorder %v302, 2048
          %vm305 = vcmp.lt.s32.totalorder %v303, 2048
          %vm306 = vmand %vm264, %vm304
          %vm307 = vmand %vm265, %vm305
          %v308 = vsel %vm306, %v266, 0.0
          %v309 = vsel %vm307, %v267, 0.0
          %v310 = vadd.f32 %v308, %v309
          %v311 = vsel %vm306, %v268, 0.0
          %v312 = vsel %vm307, %v269, 0.0
          %v313 = vadd.f32 %v311, %v312
          %v314 = vld [vmem:[%s231] sm:$0xff]
          %v315 = vadd.f32 %v314, %v310
          %316 = vst [vmem:[%s231] sm:$0xff] %v315
          %s317 = scalar_lea.vmem %s231, 8 [#allocation7]
          %v318 = vld [vmem:[%s317] sm:$0xff]
          %v319 = vadd.f32 %v318, %v313
          %320 = vst [vmem:[%s317] sm:$0xff] %v319
        $region48: #{tpu_custom_call.1} parent=27 // pred_fallthru
          _
        %s321 = sand.u32 %s106, 1
        %s322 = scalar_lea.sflag [#allocation4], %s321
        %s323 = sand.u32 %s106, 1
        %s324 = smul.addr %s323, 16
        %s325 = scalar_lea.vmem [#allocation7], %s324
        // Predicated region
        $region49: #{tpu_custom_call.1} parent=27 // pred_check
          %p326 = pneg %p116
        $region50: #{tpu_custom_call.1} parent=27 // pred_check_branch
          %328 = sbr.rel (%p326) target = $region52
        $region51: #{tpu_custom_call.1} parent=27 // pred_region
          %s329 = smul.u32 2, %s26
          %s331 = ssub.s32 256, 256
          %332 = vsyncadd %s322, %s331
          %s333 = smul.addr %s329, 128
          %s334 = scalar_lea.hbm %s2, %s333
          %s335 = sshll.u32 %s325, 4
          %s336 = int_to_ptr.vmem [resolvable:$true] %s335
          %341 = dma.vmem_to_hbm [thread:$0]  %s336, 256, %s334, %s322, 128, 128, 8
        $region52: #{tpu_custom_call.1} parent=27 // pred_fallthru
          _
      $region28: #{tpu_custom_call.1} parent=5 // pred_fallthru
        _
      %p342 = scmp.le.s32.totalorder 2, %s17
      // Predicated region
      $region53: #{tpu_custom_call.1} parent=5 // pred_check
        %p343 = pneg %p342
      $region54: #{tpu_custom_call.1} parent=5 // pred_check_branch
        %345 = sbr.rel (%p343) target = $region56
      $region55: #{tpu_custom_call.1} parent=5 // pred_region
        %s346 = ssub.s32 %s17, 2
        // Predicated region
        $region57: #{tpu_custom_call.1} parent=55 // pred_check
          %p347 = pneg %p122
        $region58: #{tpu_custom_call.1} parent=55 // pred_check_branch
          %349 = sbr.rel (%p347) target = $region60
        $region59: #{tpu_custom_call.1} parent=55 // pred_region
          %s350 = sand.u32 %s107, 1
          %s351 = scalar_lea.sflag [#allocation4], %s350
          %s352 = sand.u32 %s107, 1
          %s353 = smul.addr %s352, 16
          %s354 = scalar_lea.vmem [#allocation7], %s353
          %355 = dma.done %s351, 256
        $region60: #{tpu_custom_call.1} parent=55 // pred_fallthru
          _
      $region56: #{tpu_custom_call.1} parent=5 // pred_fallthru
        _
    $region6: #{tpu_custom_call.1} parent=1 // loop_footer
      %s21 = sadd.s32 1, %s17
    $region7: #{tpu_custom_call.1} parent=1 // loop_footer_branch
      %16 = sbr.rel target = $region3
    $region8: #{tpu_custom_call.1} parent=1 // loop_exit
      _
    %356 = vsyncpa [#allocation3], 1
    %s357 = scalar_lea.sflag [#allocation3], 1
    %358 = vsyncpa %s357, 1
    %359 = vsyncpa [#allocation6], 1
    %s360 = scalar_lea.sflag [#allocation6], 1
    %361 = vsyncpa %s360, 1
    %362 = vsyncpa [#allocation4], 1
    %s363 = scalar_lea.sflag [#allocation4], 1
    %364 = vsyncpa %s363, 1

</llo_original>
